<compile_context>
chip_gen: v7x
topology: tpu7x:2x2x1
jax: 0.10.0
libtpu: 0.0.40
codegen_flags: <defaults>
</compile_context>

<pallas_src>
import jax
import jax.numpy as jnp
from jax.experimental import pallas as pl
from jax.experimental.pallas import tpu as pltpu


# -----------------------------------------------------------------------------
# Kernel 1: gate MLP — g = sigmoid(relu(t_emb @ W1 + b1) @ W2 + b2), (B, C).
# Single block (no grid): all operands are tiny and live fully in VMEM.
# Emits directly in the activation dtype (no wrapper-side convert).
# -----------------------------------------------------------------------------
def _gate_kernel(t_ref, w1_ref, b1_ref, w2_ref, b2_ref, g_ref):
    h = jnp.dot(t_ref[...], w1_ref[...], preferred_element_type=jnp.float32)
    h = jnp.maximum(h + b1_ref[...], 0.0)
    z = jnp.dot(h, w2_ref[...], preferred_element_type=jnp.float32) + b2_ref[...]
    g_ref[...] = jax.nn.sigmoid(z).astype(g_ref.dtype)


# -----------------------------------------------------------------------------
# Kernel 2: broadcast multiply — out[b, :, s0:s0+T] = x[b, :, s0:s0+T] * g[b, :, :1]
# Pure VPU elementwise, HBM-bandwidth bound.
# -----------------------------------------------------------------------------
def _apply_gate_kernel(g_ref, x_ref, o_ref):
    # (1, C, T) * (1, C, 1) -> broadcast over the spatial (lane) axis
    o_ref[...] = x_ref[...] * g_ref[...]


def _device_kind():
    try:
        return jax.devices()[0].device_kind.lower()
    except Exception:
        return ""


def _tuning():
    kind = _device_kind()
    if "v7" in kind:
        # 3.2 TB/s per TC: bigger tiles amortize the ~0.35 us/step overhead;
        # 64 MiB physical VMEM, so raise the scoped limit explicitly.
        return dict(target_bytes=6 << 20, vmem_limit=48 << 20, min_blocks=2)
    if "v6" in kind:
        # ~4 MiB tiles (x4 pipeline bufs = 16 MiB) fit the 32 MiB scoped default.
        return dict(target_bytes=4 << 20, vmem_limit=None, min_blocks=1)
    # v5e / unknown: stay well inside the 16 MiB default scoped VMEM.
    return dict(target_bytes=2 << 20, vmem_limit=None, min_blocks=1)


def _pick_spatial_tile(hw, c, dtype_bytes, target_bytes, min_blocks=1):
    """Spatial tile: a multiple of 128 (lane-dense) whose (C, T) block stays
    around `target_bytes`. Non-dividing HW is handled by the grid via pl.cdiv
    plus a masked remainder tile; full-extent is used only when hw <= 128."""
    if hw <= 128:
        return hw                                   # full last dim: always legal
    max_t = (target_bytes // max(1, c * dtype_bytes)) // 128 * 128
    max_t = max(128, max_t)
    t = min(max_t, (hw // 128) * 128)
    if min_blocks > 1:                              # expose >=2 blocks (v7x, B==1)
        t = min(t, max(128, (pl.cdiv(hw, min_blocks) // 128) * 128))
    return t


def channel_attention(x_nchw, t_emb, w1, b1, w2, b2, *, donate_x=False):
    """x_nchw: (B, C, H, W), t_emb: (B, 512).
    w1: (512, hidden), b1: (hidden,), w2: (hidden, C), b2: (C,).
    donate_x=True aliases x into the output (caller must not reuse x)."""
    B, C, H, W = x_nchw.shape
    HW = H * W
    hidden = w1.shape[1]

    # --- gate MLP (tiny; single-block micro kernel, emits in x.dtype) ---
    gate = pl.pallas_call(
        _gate_kernel,
        out_shape=jax.ShapeDtypeStruct((B, C), x_nchw.dtype),
    )(t_emb, w1, b1.reshape(1, hidden), w2, b2.reshape(1, C))
    gate3 = gate.reshape(B, C, 1)                    # free view

    # --- broadcast multiply on the native (B, C, HW) view (no transposes) ---
    x = x_nchw.reshape(B, C, HW)                     # free view

    tune = _tuning()
    min_blocks = tune["min_blocks"] if B == 1 else 1
    t_hw = _pick_spatial_tile(HW, C, jnp.dtype(x.dtype).itemsize,
                              tune["target_bytes"], min_blocks)
    grid = (B, pl.cdiv(HW, t_hw))

    cp_kwargs = dict(dimension_semantics=("parallel", "parallel"))
    if tune["vmem_limit"] is not None:
        cp_kwargs["vmem_limit_bytes"] = tune["vmem_limit"]

    out = pl.pallas_call(
        _apply_gate_kernel,
        out_shape=jax.ShapeDtypeStruct((B, C, HW), x.dtype),
        grid_spec=pltpu.PrefetchScalarGridSpec(
            num_scalar_prefetch=0,
            grid=grid,
            in_specs=[
                pl.BlockSpec((1, C, 1), lambda b, s: (b, 0, 0)),      # gate
                pl.BlockSpec((1, C, t_hw), lambda b, s: (b, 0, s)),   # x tile
            ],
            out_specs=pl.BlockSpec((1, C, t_hw), lambda b, s: (b, 0, s)),
        ),
        compiler_params=pltpu.CompilerParams(**cp_kwargs),
        input_output_aliases={1: 0} if donate_x else {},
    )(gate3, x)

    return out.reshape(B, C, H, W)                   # free view


def _reference(x_nchw, t_emb, w1, b1, w2, b2):
    h = jnp.maximum(t_emb @ w1 + b1, 0.0)
    w = jax.nn.sigmoid(h @ w2 + b2)                  # (B, C)
    return x_nchw * w[:, :, None, None]


if __name__ == "__main__":
    # Shapes implied by the module: t_emb feature dim 512; channels >= reduction
    # (=16) for the bottleneck. Pick B=2, C=64, H=W=16.
    B, C, H, W = 2, 64, 16, 16
    reduction = 16
    hidden = C // reduction

    key = jax.random.PRNGKey(0)
    k_x, k_t, k_w1, k_b1, k_w2, k_b2 = jax.random.split(key, 6)

    x = jax.random.normal(k_x, (B, C, H, W), dtype=jnp.float32)
    t_emb = jax.random.normal(k_t, (B, 512), dtype=jnp.float32)

    # PyTorch Linear weights stored transposed: (in, out)
    w1 = jax.random.normal(k_w1, (512, hidden), dtype=jnp.float32) * 0.05
    b1 = jax.random.normal(k_b1, (hidden,), dtype=jnp.float32) * 0.05
    w2 = jax.random.normal(k_w2, (hidden, C), dtype=jnp.float32) * 0.05
    b2 = jax.random.normal(k_b2, (C,), dtype=jnp.float32) * 0.05

    out = channel_attention(x, t_emb, w1, b1, w2, b2)
    out = jax.block_until_ready(out)

    ref = _reference(x, t_emb, w1, b1, w2, b2)
    assert out.shape == (B, C, H, W)
    assert jnp.allclose(out, ref, atol=1e-5, rtol=1e-5), "mismatch vs reference"

    print("KERNEL_OK")
</pallas_src>

<mosaic_0001>
module attributes {stable_mosaic.version = 11 : i64} {
  func.func @_gate_kernel(%arg0: memref<2x512xf32, #tpu.memory_space<vmem>>, %arg1: memref<512x4xf32, #tpu.memory_space<vmem>>, %arg2: memref<1x4xf32, #tpu.memory_space<vmem>>, %arg3: memref<4x64xf32, #tpu.memory_space<vmem>>, %arg4: memref<1x64xf32, #tpu.memory_space<vmem>>, %arg5: memref<2x64xf32, #tpu.memory_space<vmem>>) attributes {dimension_semantics = [], scalar_prefetch = 0 : i64, scratch_operands = 0 : i64, tpu.core_type = #tpu.core_type<tc>} {
    %c0 = arith.constant 0 : index
    %c0_0 = arith.constant 0 : index
    %0 = vector.load %arg0[%c0, %c0_0] : memref<2x512xf32, #tpu.memory_space<vmem>>, vector<2x512xf32>
    %c0_1 = arith.constant 0 : index
    %c0_2 = arith.constant 0 : index
    %1 = vector.load %arg1[%c0_1, %c0_2] : memref<512x4xf32, #tpu.memory_space<vmem>>, vector<512x4xf32>
    %cst = arith.constant dense<0.000000e+00> : vector<2x4xf32>
    %2 = tpu.matmul %0, %1, %cst {dimension_numbers = #tpu.dot_dimension_numbers<[1], [0], [0], [1], [0, 0, 1, 1], [], []>} : vector<2x512xf32>, vector<512x4xf32>, vector<2x4xf32> -> vector<2x4xf32>
    %c0_3 = arith.constant 0 : index
    %c0_4 = arith.constant 0 : index
    %3 = vector.load %arg2[%c0_3, %c0_4] : memref<1x4xf32, #tpu.memory_space<vmem>>, vector<1x4xf32>
    %4 = vector.broadcast %3 : vector<1x4xf32> to vector<2x4xf32>
    %5 = arith.addf %2, %4 : vector<2x4xf32>
    %cst_5 = arith.constant 0.000000e+00 : f32
    %6 = vector.broadcast %cst_5 : f32 to vector<2x4xf32>
    %7 = arith.maximumf %5, %6 : vector<2x4xf32>
    %c0_6 = arith.constant 0 : index
    %c0_7 = arith.constant 0 : index
    %8 = vector.load %arg3[%c0_6, %c0_7] : memref<4x64xf32, #tpu.memory_space<vmem>>, vector<4x64xf32>
    %cst_8 = arith.constant dense<0.000000e+00> : vector<2x64xf32>
    %9 = tpu.matmul %7, %8, %cst_8 {dimension_numbers = #tpu.dot_dimension_numbers<[1], [0], [0], [1], [0, 0, 1, 1], [], []>} : vector<2x4xf32>, vector<4x64xf32>, vector<2x64xf32> -> vector<2x64xf32>
    %c0_9 = arith.constant 0 : index
    %c0_10 = arith.constant 0 : index
    %10 = vector.load %arg4[%c0_9, %c0_10] : memref<1x64xf32, #tpu.memory_space<vmem>>, vector<1x64xf32>
    %11 = vector.broadcast %10 : vector<1x64xf32> to vector<2x64xf32>
    %12 = arith.addf %9, %11 : vector<2x64xf32>
    %13 = arith.negf %12 : vector<2x64xf32>
    %14 = math.exp %13 : vector<2x64xf32>
    %cst_11 = arith.constant 1.000000e+00 : f32
    %15 = vector.broadcast %cst_11 : f32 to vector<2x64xf32>
    %16 = arith.addf %15, %14 : vector<2x64xf32>
    %17 = arith.divf %15, %16 : vector<2x64xf32>
    %c0_12 = arith.constant 0 : index
    %c0_13 = arith.constant 0 : index
    %18 = vector.load %arg5[%c0_12, %c0_13] : memref<2x64xf32, #tpu.memory_space<vmem>>, vector<2x64xf32>
    tpu.vector_store %arg5[%c0_12, %c0_13], %17 {strides = array<i32>} : memref<2x64xf32, #tpu.memory_space<vmem>>, vector<2x64xf32>,
    return
  }
}

</mosaic_0001>

<llo_original>
// kernel: tpu_custom_call.1
$region0: #{tpu_custom_call.1}
  #allocation0 [shape = 'u32[]', space=smem, size = 0x4, offset = 0x4, fixed_abs, tag = 'smem constant byte address 0x4 - core index']
  #allocation1 [shape = 'u32[144,128]{1,0:T(1,128)}', space=vmem, size = 0x12000, scoped, tag = 'internal scratch']
  %s0 = inlined_call_operand.vmem [shape: f32[2,512], index: 0, kind: input, shape index: {}]
  %s1 = inlined_call_operand.vmem [shape: f32[512,4], index: 1, kind: input, shape index: {}]
  %s2 = inlined_call_operand.vmem [shape: f32[1,4], index: 2, kind: input, shape index: {}]
  %s3 = inlined_call_operand.vmem [shape: f32[4,64], index: 3, kind: input, shape index: {}]
  %s4 = inlined_call_operand.vmem [shape: f32[1,64], index: 4, kind: input, shape index: {}]
  %s5 = inlined_call_operand.hbm [shape: f32[2,64], index: 5, kind: output, shape index: {}]
  %s6 = sld [smem:[#allocation0]]
  $region30: #{tpu_custom_call.1} parent=0
    _
  %s8 = ssub.s32 1, %s6
  %s9 = scalar_select 0, %s8, %s6
  $region1: #{tpu_custom_call.1} parent=0
    #allocation2 [shape = 'u8[1024]{0}', space=vmem, size = 0x400, scoped, tag = 'output window, operand 0, single buffered']
    #allocation3 [shape = 's32[1]{0}', space=sflag, size = 0x4, scoped, tag = 'scoped memory for tpu_custom_call.1']
    %10 = vsyncpa [#allocation3], 0
    // Predicated region
    $region2: #{tpu_custom_call.1} parent=1 // pred_check
      _
    $region3: #{tpu_custom_call.1} parent=1 // pred_check_branch
      %12 = sbr.rel (0) target = $region5
    $region4: #{tpu_custom_call.1} parent=1 // pred_region
      _
    $region5: #{tpu_custom_call.1} parent=1 // pred_fallthru
      _
    // Predicated region
    $region6: #{tpu_custom_call.1} parent=1 // pred_check
      _
    $region7: #{tpu_custom_call.1} parent=1 // pred_check_branch
      %14 = sbr.rel (0) target = $region9
    $region8: #{tpu_custom_call.1} parent=1 // pred_region
      _
    $region9: #{tpu_custom_call.1} parent=1 // pred_fallthru
      _
    // Predicated region
    $region10: #{tpu_custom_call.1} parent=1 // pred_check
      _
    $region11: #{tpu_custom_call.1} parent=1 // pred_check_branch
      %16 = sbr.rel (0) target = $region13
    $region12: #{tpu_custom_call.1} parent=1 // pred_region
      _
    $region13: #{tpu_custom_call.1} parent=1 // pred_fallthru
      _
    // Predicated region
    $region14: #{tpu_custom_call.1} parent=1 // pred_check
      _
    $region15: #{tpu_custom_call.1} parent=1 // pred_check_branch
      %18 = sbr.rel (0) target = $region17
    $region16: #{tpu_custom_call.1} parent=1 // pred_region
      _
    $region17: #{tpu_custom_call.1} parent=1 // pred_fallthru
      _
    // Predicated region
    $region18: #{tpu_custom_call.1} parent=1 // pred_check
      _
    $region19: #{tpu_custom_call.1} parent=1 // pred_check_branch
      %20 = sbr.rel (0) target = $region21
    $region20: #{tpu_custom_call.1} parent=1 // pred_region
      _
    $region21: #{tpu_custom_call.1} parent=1 // pred_fallthru
      _
    %v21 = vld [vmem:[%s0] sm:$0xff]
    %v22 = vld [vmem:[%s1] sm:$0xff]
    %v23 = vld [vmem:[%s1 + $0x8] sm:$0xff]
    %v24 = vld [vmem:[%s1 + $0x10] sm:$0xff]
    %v25 = vld [vmem:[%s1 + $0x18] sm:$0xff]
    %v26 = vld [vmem:[%s1 + $0x20] sm:$0xff]
    %v27 = vld [vmem:[%s1 + $0x28] sm:$0xff]
    %v28 = vld [vmem:[%s1 + $0x30] sm:$0xff]
    %v29 = vld [vmem:[%s1 + $0x38] sm:$0xff]
    %v30 = vld [vmem:[%s1 + $0x40] sm:$0xff]
    %v31 = vld [vmem:[%s1 + $0x48] sm:$0xff]
    %v32 = vld [vmem:[%s1 + $0x50] sm:$0xff]
    %v33 = vld [vmem:[%s1 + $0x58] sm:$0xff]
    %v34 = vld [vmem:[%s1 + $0x60] sm:$0xff]
    %v35 = vld [vmem:[%s1 + $0x68] sm:$0xff]
    %v36 = vld [vmem:[%s1 + $0x70] sm:$0xff]
    %v37 = vld [vmem:[%s1 + $0x78] sm:$0xff]
    %v38 = vld [vmem:[%s1 + $0x80] sm:$0xff]
    %v39 = vld [vmem:[%s1 + $0x88] sm:$0xff]
    %v40 = vld [vmem:[%s1 + $0x90] sm:$0xff]
    %v41 = vld [vmem:[%s1 + $0x98] sm:$0xff]
    %v42 = vld [vmem:[%s1 + $0xa0] sm:$0xff]
    %v43 = vld [vmem:[%s1 + $0xa8] sm:$0xff]
    %v44 = vld [vmem:[%s1 + $0xb0] sm:$0xff]
    %v45 = vld [vmem:[%s1 + $0xb8] sm:$0xff]
    %v46 = vld [vmem:[%s1 + $0xc0] sm:$0xff]
    %v47 = vld [vmem:[%s1 + $0xc8] sm:$0xff]
    %v48 = vld [vmem:[%s1 + $0xd0] sm:$0xff]
    %v49 = vld [vmem:[%s1 + $0xd8] sm:$0xff]
    %v50 = vld [vmem:[%s1 + $0xe0] sm:$0xff]
    %v51 = vld [vmem:[%s1 + $0xe8] sm:$0xff]
    %v52 = vld [vmem:[%s1 + $0xf0] sm:$0xff]
    %v53 = vld [vmem:[%s1 + $0xf8] sm:$0xff]
    %v54 = vld [vmem:[%s1 + $0x100] sm:$0xff]
    %v55 = vld [vmem:[%s1 + $0x108] sm:$0xff]
    %v56 = vld [vmem:[%s1 + $0x110] sm:$0xff]
    %v57 = vld [vmem:[%s1 + $0x118] sm:$0xff]
    %v58 = vld [vmem:[%s1 + $0x120] sm:$0xff]
    %v59 = vld [vmem:[%s1 + $0x128] sm:$0xff]
    %v60 = vld [vmem:[%s1 + $0x130] sm:$0xff]
    %v61 = vld [vmem:[%s1 + $0x138] sm:$0xff]
    %v62 = vld [vmem:[%s1 + $0x140] sm:$0xff]
    %v63 = vld [vmem:[%s1 + $0x148] sm:$0xff]
    %v64 = vld [vmem:[%s1 + $0x150] sm:$0xff]
    %v65 = vld [vmem:[%s1 + $0x158] sm:$0xff]
    %v66 = vld [vmem:[%s1 + $0x160] sm:$0xff]
    %v67 = vld [vmem:[%s1 + $0x168] sm:$0xff]
    %v68 = vld [vmem:[%s1 + $0x170] sm:$0xff]
    %v69 = vld [vmem:[%s1 + $0x178] sm:$0xff]
    %v70 = vld [vmem:[%s1 + $0x180] sm:$0xff]
    %v71 = vld [vmem:[%s1 + $0x188] sm:$0xff]
    %v72 = vld [vmem:[%s1 + $0x190] sm:$0xff]
    %v73 = vld [vmem:[%s1 + $0x198] sm:$0xff]
    %v74 = vld [vmem:[%s1 + $0x1a0] sm:$0xff]
    %v75 = vld [vmem:[%s1 + $0x1a8] sm:$0xff]
    %v76 = vld [vmem:[%s1 + $0x1b0] sm:$0xff]
    %v77 = vld [vmem:[%s1 + $0x1b8] sm:$0xff]
    %v78 = vld [vmem:[%s1 + $0x1c0] sm:$0xff]
    %v79 = vld [vmem:[%s1 + $0x1c8] sm:$0xff]
    %v80 = vld [vmem:[%s1 + $0x1d0] sm:$0xff]
    %v81 = vld [vmem:[%s1 + $0x1d8] sm:$0xff]
    %v82 = vld [vmem:[%s1 + $0x1e0] sm:$0xff]
    %v83 = vld [vmem:[%s1 + $0x1e8] sm:$0xff]
    %v84 = vld [vmem:[%s1 + $0x1f0] sm:$0xff]
    %v85 = vld [vmem:[%s1 + $0x1f8] sm:$0xff]
    %v86 = vld [vmem:[%s2] sm:$0x1]
    %v88 = vlaneseq
    %v89 = vshrl.u32 %v88, 7
    %v90 = vsub.s32 0, %v89
    %v91 = vrot.slane %v86, %v90
    %v94 = vcombine.high %v21, %v21
    %v96 = vunpack.c.l.s4 1983009808
    %v97 = vunpack.c.0.s8 %v96
    %v98 = vlaneseq
    %v99 = vshrl.u32 %v98, 7
    %v100 = vsub.s32 %v97, %v99
    %v101 = vrot.slane %v21, %v100
    %v103 = vunpack.c.l.s4 1983009808
    %v104 = vunpack.c.0.s8 %v103
    %v105 = vlaneseq
    %v106 = vshrl.u32 %v105, 7
    %v107 = vsub.s32 %v104, %v106
    %v108 = vrot.slane %v94, %v107
    %v109 = vcombine.high %v101, %v101
    %v110 = vcombine.high %v108, %v108
    %115 = vmatprep.subr.mxu0 0.0
    %116 = vmatpush1.msra.mxu0 %v22
    %117 = vmatprep.subr.mxu0 0.0
    %118 = vmatpush1.msra.mxu0 %v23
    %119 = vmatprep.subr.mxu0 0.0
    %120 = vmatpush1.msra.mxu0 %v24
    %121 = vmatprep.subr.mxu0 0.0
    %122 = vmatpush1.msra.mxu0 %v25
    %123 = vmatprep.subr.mxu0 0.0
    %124 = vmatpush1.msra.mxu0 %v26
    %125 = vmatprep.subr.mxu0 0.0
    %126 = vmatpush1.msra.mxu0 %v27
    %127 = vmatprep.subr.mxu0 0.0
    %128 = vmatpush1.msra.mxu0 %v28
    %129 = vmatprep.subr.mxu0 0.0
    %130 = vmatpush1.msra.mxu0 %v29
    %131 = vmatprep.subr.mxu0 0.0
    %132 = vmatpush1.msra.mxu0 %v30
    %133 = vmatprep.subr.mxu0 0.0
    %134 = vmatpush1.msra.mxu0 %v31
    %135 = vmatprep.subr.mxu0 0.0
    %136 = vmatpush1.msra.mxu0 %v32
    %137 = vmatprep.subr.mxu0 0.0
    %138 = vmatpush1.msra.mxu0 %v33
    %139 = vmatprep.subr.mxu0 0.0
    %140 = vmatpush1.msra.mxu0 %v34
    %141 = vmatprep.subr.mxu0 0.0
    %142 = vmatpush1.msra.mxu0 %v35
    %143 = vmatprep.subr.mxu0 0.0
    %144 = vmatpush1.msra.mxu0 %v36
    %145 = vmatprep.subr.mxu0 0.0
    %146 = vmatpush1.msra.mxu0 %v37
    %147 = vmatprep.subr.mxu0 0.0
    %148 = vmatpush1.msra.mxu0 %v38
    %149 = vmatprep.subr.mxu0 0.0
    %150 = vmatpush1.msra.mxu0 %v39
    %151 = vmatprep.subr.mxu0 0.0
    %152 = vmatpush1.msra.mxu0 %v40
    %153 = vmatprep.subr.mxu0 0.0
    %154 = vmatpush1.msra.mxu0 %v41
    %155 = vmatprep.subr.mxu0 0.0
    %156 = vmatpush1.msra.mxu0 %v42
    %157 = vmatprep.subr.mxu0 0.0
    %158 = vmatpush1.msra.mxu0 %v43
    %159 = vmatprep.subr.mxu0 0.0
    %160 = vmatpush1.msra.mxu0 %v44
    %161 = vmatprep.subr.mxu0 0.0
    %162 = vmatpush1.msra.mxu0 %v45
    %163 = vmatprep.subr.mxu0 0.0
    %164 = vmatpush1.msra.mxu0 %v46
    %165 = vmatprep.subr.mxu0 0.0
    %166 = vmatpush1.msra.mxu0 %v47
    %167 = vmatprep.subr.mxu0 0.0
    %168 = vmatpush1.msra.mxu0 %v48
    %169 = vmatprep.subr.mxu0 0.0
    %170 = vmatpush1.msra.mxu0 %v49
    %171 = vmatprep.subr.mxu0 0.0
    %172 = vmatpush1.msra.mxu0 %v50
    %173 = vmatprep.subr.mxu0 0.0
    %174 = vmatpush1.msra.mxu0 %v51
    %175 = vmatprep.subr.mxu0 0.0
    %176 = vmatpush1.msra.mxu0 %v52
    %177 = vmatprep.subr.mxu0 0.0
    %178 = vmatpush1.msra.mxu0 %v53
    %179 = vmatprep.mubr.f32.mxu0 %v109
    %180 = vmatmul.mubr.f32.gmra.mrb[0].mxu0 %v101
    %v181 = vpop.f32.mrb[0].mxu0
    %v182 = vadd.f32 %v91, %v181
    %v183 = vpop.f32.mrb[0].mxu0
    %184 = vdwg.mxu0
    %185 = vmatprep.subr.mxu0 0.0
    %186 = vmatpush1.msra.mxu0 %v54
    %187 = vmatprep.subr.mxu0 0.0
    %188 = vmatpush1.msra.mxu0 %v55
    %189 = vmatprep.subr.mxu0 0.0
    %190 = vmatpush1.msra.mxu0 %v56
    %191 = vmatprep.subr.mxu0 0.0
    %192 = vmatpush1.msra.mxu0 %v57
    %193 = vmatprep.subr.mxu0 0.0
    %194 = vmatpush1.msra.mxu0 %v58
    %195 = vmatprep.subr.mxu0 0.0
    %196 = vmatpush1.msra.mxu0 %v59
    %197 = vmatprep.subr.mxu0 0.0
    %198 = vmatpush1.msra.mxu0 %v60
    %199 = vmatprep.subr.mxu0 0.0
    %200 = vmatpush1.msra.mxu0 %v61
    %201 = vmatprep.subr.mxu0 0.0
    %202 = vmatpush1.msra.mxu0 %v62
    %203 = vmatprep.subr.mxu0 0.0
    %204 = vmatpush1.msra.mxu0 %v63
    %205 = vmatprep.subr.mxu0 0.0
    %206 = vmatpush1.msra.mxu0 %v64
    %207 = vmatprep.subr.mxu0 0.0
    %208 = vmatpush1.msra.mxu0 %v65
    %209 = vmatprep.subr.mxu0 0.0
    %210 = vmatpush1.msra.mxu0 %v66
    %211 = vmatprep.subr.mxu0 0.0
    %212 = vmatpush1.msra.mxu0 %v67
    %213 = vmatprep.subr.mxu0 0.0
    %214 = vmatpush1.msra.mxu0 %v68
    %215 = vmatprep.subr.mxu0 0.0
    %216 = vmatpush1.msra.mxu0 %v69
    %217 = vmatprep.subr.mxu0 0.0
    %218 = vmatpush1.msra.mxu0 %v70
    %219 = vmatprep.subr.mxu0 0.0
    %220 = vmatpush1.msra.mxu0 %v71
    %221 = vmatprep.subr.mxu0 0.0
    %222 = vmatpush1.msra.mxu0 %v72
    %223 = vmatprep.subr.mxu0 0.0
    %224 = vmatpush1.msra.mxu0 %v73
    %225 = vmatprep.subr.mxu0 0.0
    %226 = vmatpush1.msra.mxu0 %v74
    %227 = vmatprep.subr.mxu0 0.0
    %228 = vmatpush1.msra.mxu0 %v75
    %229 = vmatprep.subr.mxu0 0.0
    %230 = vmatpush1.msra.mxu0 %v76
    %231 = vmatprep.subr.mxu0 0.0
    %232 = vmatpush1.msra.mxu0 %v77
    %233 = vmatprep.subr.mxu0 0.0
    %234 = vmatpush1.msra.mxu0 %v78
    %235 = vmatprep.subr.mxu0 0.0
    %236 = vmatpush1.msra.mxu0 %v79
    %237 = vmatprep.subr.mxu0 0.0
    %238 = vmatpush1.msra.mxu0 %v80
    %239 = vmatprep.subr.mxu0 0.0
    %240 = vmatpush1.msra.mxu0 %v81
    %241 = vmatprep.subr.mxu0 0.0
    %242 = vmatpush1.msra.mxu0 %v82
    %243 = vmatprep.subr.mxu0 0.0
    %244 = vmatpush1.msra.mxu0 %v83
    %245 = vmatprep.subr.mxu0 0.0
    %246 = vmatpush1.msra.mxu0 %v84
    %247 = vmatprep.subr.mxu0 0.0
    %248 = vmatpush1.msra.mxu0 %v85
    %249 = vmatprep.mubr.f32.mxu0 %v110
    %250 = vmatmul.mubr.f32.gmra.mrb[0].mxu0 %v108
    %v251 = vpop.f32.mrb[0].mxu0
    %v252 = vadd.f32 %v182, %v251
    %v253 = vpop.f32.mrb[0].mxu0
    %254 = vdwg.mxu0
    %v255 = vmax.f32 %v252, 0.0
    %v256 = vld [vmem:[%s3] sm:$0xf]
    %v257 = vld [vmem:[%s4] sm:$0x1]
    %v259 = vlaneseq
    %v260 = vshrl.u32 %v259, 7
    %v261 = vsub.s32 0, %v260
    %v262 = vrot.slane %v257, %v261
    %vm264 = vcmask 31744
    %v266 = vsel %vm264, %v255, 0
    %vm268 = vcmask 1043456
    %v270 = vsel %vm268, %v256, 0
    %272 = vmatprep.subr.mxu0 0.0
    %273 = vmatpush1.msra.mxu0 %v270
    %274 = vmatprep.subr.mxu0 0.0
    %275 = vmatpush1.msra.mxu0 0.0
    %276 = vmatprep.subr.mxu0 0.0
    %277 = vmatpush1.msra.mxu0 0.0
    %278 = vmatprep.subr.mxu0 0.0
    %279 = vmatpush1.msra.mxu0 0.0
    %280 = vmatprep.subr.mxu0 0.0
    %281 = vmatpush1.msra.mxu0 0.0
    %282 = vmatprep.subr.mxu0 0.0
    %283 = vmatpush1.msra.mxu0 0.0
    %284 = vmatprep.subr.mxu0 0.0
    %285 = vmatpush1.msra.mxu0 0.0
    %286 = vmatprep.subr.mxu0 0.0
    %287 = vmatpush1.msra.mxu0 0.0
    %288 = vmatprep.subr.mxu0 0.0
    %289 = vmatpush1.msra.mxu0 0.0
    %290 = vmatprep.subr.mxu0 0.0
    %291 = vmatpush1.msra.mxu0 0.0
    %292 = vmatprep.subr.mxu0 0.0
    %293 = vmatpush1.msra.mxu0 0.0
    %294 = vmatprep.subr.mxu0 0.0
    %295 = vmatpush1.msra.mxu0 0.0
    %296 = vmatprep.subr.mxu0 0.0
    %297 = vmatpush1.msra.mxu0 0.0
    %298 = vmatprep.subr.mxu0 0.0
    %299 = vmatpush1.msra.mxu0 0.0
    %300 = vmatprep.subr.mxu0 0.0
    %301 = vmatpush1.msra.mxu0 0.0
    %302 = vmatprep.subr.mxu0 0.0
    %303 = vmatpush1.msra.mxu0 0.0
    %304 = vmatprep.subr.mxu0 0.0
    %305 = vmatpush1.msra.mxu0 0.0
    %306 = vmatprep.subr.mxu0 0.0
    %307 = vmatpush1.msra.mxu0 0.0
    %308 = vmatprep.subr.mxu0 0.0
    %309 = vmatpush1.msra.mxu0 0.0
    %310 = vmatprep.subr.mxu0 0.0
    %311 = vmatpush1.msra.mxu0 0.0
    %312 = vmatprep.subr.mxu0 0.0
    %313 = vmatpush1.msra.mxu0 0.0
    %314 = vmatprep.subr.mxu0 0.0
    %315 = vmatpush1.msra.mxu0 0.0
    %316 = vmatprep.subr.mxu0 0.0
    %317 = vmatpush1.msra.mxu0 0.0
    %318 = vmatprep.subr.mxu0 0.0
    %319 = vmatpush1.msra.mxu0 0.0
    %320 = vmatprep.subr.mxu0 0.0
    %321 = vmatpush1.msra.mxu0 0.0
    %322 = vmatprep.subr.mxu0 0.0
    %323 = vmatpush1.msra.mxu0 0.0
    %324 = vmatprep.subr.mxu0 0.0
    %325 = vmatpush1.msra.mxu0 0.0
    %326 = vmatprep.subr.mxu0 0.0
    %327 = vmatpush1.msra.mxu0 0.0
    %328 = vmatprep.subr.mxu0 0.0
    %329 = vmatpush1.msra.mxu0 0.0
    %330 = vmatprep.subr.mxu0 0.0
    %331 = vmatpush1.msra.mxu0 0.0
    %332 = vmatprep.subr.mxu0 0.0
    %333 = vmatpush1.msra.mxu0 0.0
    %334 = vmatprep.subr.mxu0 0.0
    %335 = vmatpush1.msra.mxu0 0.0
    %336 = vmatprep.mubr.f32.mxu0 0.0
    %337 = vmatmul.mubr.f32.gmra.mrb[0].mxu0 %v266
    %v338 = vpop.f32.mrb[0].mxu0
    %v339 = vadd.f32 %v262, %v338
    %v340 = vpop.f32.mrb[0].mxu0
    %341 = vdwg.mxu0
    %v342 = vxor.u32 %v339, 2147483648
    %v343 = vmul.f32 %v342, 1.442695
    %v344 = vpow.pop %v343
    %v345 = vadd.f32 %v344, 1.0
    %v346 = vrcp.pop %v345
    %v347 = vmul.f32 1.0, %v346
    %vm348 = vcmask 517120
    %349 = vst.msk [vmem:[#allocation2] sm:$0x3] %vm348, %v347
    // Predicated region
    $region22: #{tpu_custom_call.1} parent=1 // pred_check
      _
    $region23: #{tpu_custom_call.1} parent=1 // pred_check_branch
      %351 = sbr.rel (0) target = $region25
    $region24: #{tpu_custom_call.1} parent=1 // pred_region
      %s353 = ssub.s32 32, 32
      %354 = vsyncadd [#allocation3], %s353
      %s356 = sshll.u32 [#allocation2], 4
      %s357 = int_to_ptr.vmem [resolvable:$true] %s356
      %359 = dma.vmem_to_hbm [thread:$0]  %s357, 32, %s5, [#allocation3]
    $region25: #{tpu_custom_call.1} parent=1 // pred_fallthru
      _
    // Predicated region
    $region26: #{tpu_custom_call.1} parent=1 // pred_check
      _
    $region27: #{tpu_custom_call.1} parent=1 // pred_check_branch
      %361 = sbr.rel (0) target = $region29
    $region28: #{tpu_custom_call.1} parent=1 // pred_region
      %362 = dma.done [#allocation3], 32
    $region29: #{tpu_custom_call.1} parent=1 // pred_fallthru
      _
    %363 = vsyncpa [#allocation3], 1

</llo_original>
